<compile_context>
chip_gen: v5e
topology: v5e:2x2
jax: 0.10.0
libtpu: 0.0.40
codegen_flags: <defaults>
</compile_context>

<pallas_src>
import functools

import jax
import jax.numpy as jnp
from jax.experimental import pallas as pl
from jax.experimental.pallas import tpu as pltpu

_LANES = 128
_MIN_STEPS = 4  # ensure >=2 steps/TC for megacore sharding + pipeline overlap


def _round_up(a: int, b: int) -> int:
    return -(-a // b) * b


def _chip_block_params():
    """(block_bytes, vmem_limit_bytes) chosen per TPU generation."""
    try:
        kind = jax.devices()[0].device_kind.lower()
    except Exception:  # pragma: no cover - backend not initialized
        kind = ""
    if "v7" in kind:
        # ~3.2 TB/s HBM, but only 64 MiB physical / 32 MiB default scoped VMEM:
        # 6 MiB blocks -> 4x6 = 24 MiB double-buffered; bump limit explicitly.
        return 6 * 1024 * 1024, 48 * 1024 * 1024
    if "v6" in kind:
        # ~1.4 TB/s HBM; 4 MiB blocks -> 16 MiB, fits 32 MiB default scoped VMEM.
        return 4 * 1024 * 1024, None
    # v5e (0.82 TB/s, 16 MiB default scoped VMEM) and unknown chips: 2 MiB
    # blocks keep per-step overhead ~7% without any VMEM-limit bump.
    return 2 * 1024 * 1024, None


def _star_relu_kernel(x_ref, o_ref, *, scale: float, bias: float):
    x = x_ref[...].astype(jnp.float32)
    x_ = jnp.maximum(x, 0.0)  # relu
    o_ref[...] = (scale * x_ * x_ + bias).astype(o_ref.dtype)


def star_relu(x: jax.Array, *, scale: float = 0.8944, bias: float = -0.4472,
              donate: bool = False) -> jax.Array:
    """Apply StarReLU elementwise (float16 / bfloat16 / float32 inputs).

    Set donate=True only when the enclosing jit actually donates `x`;
    otherwise aliasing would force a defensive full-tensor copy.
    """
    orig_shape = x.shape
    dtype = x.dtype
    itemsize = jnp.dtype(dtype).itemsize
    sublane = max(8, 32 // itemsize)  # 8 (f32), 16 (bf16/f16), 32 (8-bit)
    n = x.size

    def _jnp_path(v):
        v_ = jnp.maximum(v.astype(jnp.float32), 0.0)
        return (scale * v_ * v_ + bias).astype(dtype)

    n_main = (n // _LANES) * _LANES
    if n_main == 0:
        # Tensor smaller than one lane row — not worth a kernel launch.
        return _jnp_path(x)

    flat = jnp.reshape(x, (-1,))
    main = flat if n_main == n else flat[:n_main]
    rows = n_main // _LANES
    slab = main.reshape(rows, _LANES)

    block_bytes, vmem_limit = _chip_block_params()
    target_rows = max(
        sublane, (block_bytes // (_LANES * itemsize)) // sublane * sublane)

    if rows > target_rows:
        tile_rows = target_rows
    else:
        # Mid/small slab: split into ~_MIN_STEPS sublane-aligned blocks so both
        # v7x TensorCores and DMA/compute overlap are used; never exceed rows.
        tile_rows = min(rows,
                        max(sublane, _round_up(pl.cdiv(rows, _MIN_STEPS), sublane)))
    grid = (pl.cdiv(rows, tile_rows),)  # ragged last block is clipped by Pallas

    kernel = functools.partial(_star_relu_kernel,
                               scale=float(scale), bias=float(bias))
    out = pl.pallas_call(
        kernel,
        out_shape=jax.ShapeDtypeStruct((rows, _LANES), dtype),
        grid=grid,
        in_specs=[pl.BlockSpec((tile_rows, _LANES), lambda i: (i, 0))],
        out_specs=pl.BlockSpec((tile_rows, _LANES), lambda i: (i, 0)),
        input_output_aliases=({0: 0} if donate else {}),
        cost_estimate=pl.CostEstimate(
            flops=3 * n_main, transcendentals=0,
            bytes_accessed=2 * n_main * itemsize),
        compiler_params=pltpu.CompilerParams(
            dimension_semantics=("parallel",),
            vmem_limit_bytes=vmem_limit),
    )(slab)

    if n_main < n:
        tail_out = _jnp_path(flat[n_main:])
        out_flat = jnp.concatenate([out.reshape(-1), tail_out])
    else:
        out_flat = out.reshape(-1)
    return out_flat.reshape(orig_shape)


def _star_relu_ref(x):
    x_ = jnp.maximum(x.astype(jnp.float32), 0.0)
    return (0.8944 * x_ * x_ - 0.4472).astype(x.dtype)


if __name__ == "__main__":
    key = jax.random.PRNGKey(0)

    # Main path: NCHW activation, n % 128 == 0.
    x = jax.random.normal(key, (2, 4, 16, 16), dtype=jnp.float32)
    y = jax.block_until_ready(star_relu(x))
    assert y.shape == x.shape and y.dtype == x.dtype
    assert jnp.allclose(y, _star_relu_ref(x), atol=1e-6, rtol=1e-6)

    # Tiny tensor (< 128 elements): pure jnp fallback path.
    x2 = jax.random.normal(jax.random.PRNGKey(1), (3, 5, 7), dtype=jnp.float32)
    y2 = jax.block_until_ready(star_relu(x2))
    assert y2.shape == x2.shape and y2.dtype == x2.dtype
    assert jnp.allclose(y2, _star_relu_ref(x2), atol=1e-6, rtol=1e-6)

    # Ragged size with a kernel-sized main slab + jnp tail (n = 150).
    x3 = jax.random.normal(jax.random.PRNGKey(2), (3, 50), dtype=jnp.float32)
    y3 = jax.block_until_ready(star_relu(x3))
    assert y3.shape == x3.shape and y3.dtype == x3.dtype
    assert jnp.allclose(y3, _star_relu_ref(x3), atol=1e-6, rtol=1e-6)

    # bf16 path (sublane=16 tiling, f32 internal compute).
    x4 = jax.random.normal(jax.random.PRNGKey(3), (4, 256), dtype=jnp.bfloat16)
    y4 = jax.block_until_ready(star_relu(x4))
    assert y4.shape == x4.shape and y4.dtype == x4.dtype
    assert jnp.allclose(y4.astype(jnp.float32),
                        _star_relu_ref(x4).astype(jnp.float32),
                        atol=2e-2, rtol=2e-2)

    print("KERNEL_OK")
</pallas_src>

<mosaic_0001>
module attributes {stable_mosaic.version = 11 : i64} {
  func.func @_star_relu_kernel(%arg0: i32, %arg1: memref<8x128xf32, #tpu.memory_space<vmem>>, %arg2: memref<8x128xf32, #tpu.memory_space<vmem>>) attributes {dimension_semantics = [#tpu.dimension_semantics<parallel>], iteration_bounds = array<i64: 2>, scalar_prefetch = 0 : i64, scratch_operands = 0 : i64, tpu.core_type = #tpu.core_type<tc>, window_params = [{transform_indices = @transform_0, window_bounds = array<i64: 8, 128>}, {transform_indices = @transform_1, window_bounds = array<i64: 8, 128>}]} {
    %c0 = arith.constant 0 : index
    %c0_0 = arith.constant 0 : index
    %0 = vector.load %arg1[%c0, %c0_0] : memref<8x128xf32, #tpu.memory_space<vmem>>, vector<8x128xf32>
    %cst = arith.constant 0.000000e+00 : f32
    %1 = vector.broadcast %cst : f32 to vector<8x128xf32>
    %2 = arith.maximumf %0, %1 : vector<8x128xf32>
    %cst_1 = arith.constant 8.944000e-01 : f32
    %3 = vector.broadcast %cst_1 : f32 to vector<8x128xf32>
    %4 = arith.mulf %3, %2 : vector<8x128xf32>
    %5 = arith.mulf %4, %2 : vector<8x128xf32>
    %cst_2 = arith.constant -4.472000e-01 : f32
    %6 = vector.broadcast %cst_2 : f32 to vector<8x128xf32>
    %7 = arith.addf %5, %6 : vector<8x128xf32>
    %c0_3 = arith.constant 0 : index
    %c0_4 = arith.constant 0 : index
    %8 = vector.load %arg2[%c0_3, %c0_4] : memref<8x128xf32, #tpu.memory_space<vmem>>, vector<8x128xf32>
    tpu.vector_store %arg2[%c0_3, %c0_4], %7 {strides = array<i32>} : memref<8x128xf32, #tpu.memory_space<vmem>>, vector<8x128xf32>,
    return
  }
  func.func @transform_0(%arg0: i32) -> (i32, i32) {
    %c0_i32 = arith.constant 0 : i32
    %c0_i32_0 = arith.constant 0 : i32
    return %arg0, %c0_i32 : i32, i32
  }
  func.func @transform_1(%arg0: i32) -> (i32, i32) {
    %c0_i32 = arith.constant 0 : i32
    %c0_i32_0 = arith.constant 0 : i32
    return %arg0, %c0_i32 : i32, i32
  }
}

</mosaic_0001>

<llo_original>
// kernel: tpu_custom_call.1
$region0: #{tpu_custom_call.1}
  #allocation0 [shape = 'u32[]', space=smem, size = 0x4, offset = 0x4, fixed_abs, tag = 'smem constant byte address 0x4 - core index']
  #allocation1 [shape = 'u32[72,128]{1,0:T(1,128)}', space=vmem, size = 0x9000, scoped, tag = 'internal scratch']
  %s0 = inlined_call_operand.hbm [shape: f32[16,128], index: 0, kind: input, shape index: {}]
  %s1 = inlined_call_operand.hbm [shape: f32[16,128], index: 1, kind: output, shape index: {}]
  %s2 = sld [smem:[#allocation0]]
  $region41: #{tpu_custom_call.1} parent=0
    _
  %s4 = ssub.s32 1, %s2
  %s5 = scalar_select 0, %s4, %s2
  $region1: #{tpu_custom_call.1} parent=0
    #allocation2 [shape = 'u8[8192]{0}', space=vmem, size = 0x2000, scoped, tag = 'input window, operand 0']
    #allocation3 [shape = 's32[2]{0}', space=sflag, size = 0x8, scoped, tag = 'scoped memory for tpu_custom_call.1']
    #allocation4 [shape = 's32[2]{0}', space=sflag, size = 0x8, scoped, tag = 'scoped memory for tpu_custom_call.1']
    #allocation5 [shape = 'u8[8192]{0}', space=vmem, size = 0x2000, scoped, tag = 'output window, operand 0']
    %6 = vsyncpa [#allocation3], 0
    %s7 = scalar_lea.sflag [#allocation3], 1
    %8 = vsyncpa %s7, 0
    %9 = vsyncpa [#allocation4], 0
    %s10 = scalar_lea.sflag [#allocation4], 1
    %11 = vsyncpa %s10, 0
    loop: start=0, step=1, limit=4
    $region2: #{tpu_custom_call.1} parent=1 // loop_pre_header
      _
    $region3: #{tpu_custom_call.1} parent=1 // loop_header
      %s13 = sphi 0, %s17
      %p14 = scmp.ge.s32.totalorder %s13, 4
      %s23 = sphi 0, %s25
      %s26 = sphi 0, %s23
      %s27 = sphi 0, %s26
      %s43 = sphi 0, %s27
      %s49 = sphi 0, %s51
      %s52 = sphi 0, %s49
      %s53 = sphi 0, %s52
      %s69 = sphi 0, %s53
    $region4: #{tpu_custom_call.1} parent=1 // loop_header_branch
      %16 = sbr.rel (%p14) target = $region8
    $region5: #{tpu_custom_call.1} parent=1 // loop_body
      %s18 = ssub.s32 %s13, 1
      %s19 = ssub.s32 %s13, 2
      %s20 = sadd.s32 %s13, 1
      %s21 = ssub.s32 %s13, %s20
      %p22 = scmp.eq.s32.totalorder %s21, 0
      %s24 = sadd.s32 %s23, 1
      %s25 = scalar_select %p22, %s23, %s24
      %p28 = pneg %p22
      %p29 = scmp.eq.s32.totalorder %s13, 1
      %p30 = por %p28, %p29
      %p31 = scmp.ne.s32.totalorder %s23, %s26
      %p32 = scmp.eq.s32.totalorder %s13, 0
      %p33 = por %p31, %p32
      %p34 = scmp.ne.s32.totalorder %s23, %s26
      %p35 = scmp.eq.s32.totalorder %s18, 1
      %p36 = por %p34, %p35
      %p37 = scmp.ne.s32.totalorder %s26, %s27
      %p38 = scmp.eq.s32.totalorder %s18, 0
      %p39 = por %p37, %p38
      %p40 = scmp.ne.s32.totalorder %s26, %s27
      %p41 = scmp.eq.s32.totalorder %s19, 1
      %p42 = por %p40, %p41
      %p44 = scmp.ne.s32.totalorder %s27, %s43
      %p45 = scmp.eq.s32.totalorder %s19, 0
      %p46 = por %p44, %p45
      %s47 = ssub.s32 %s13, %s20
      %p48 = scmp.eq.s32.totalorder %s47, 0
      %s50 = sadd.s32 %s49, 1
      %s51 = scalar_select %p48, %s49, %s50
      %p54 = pneg %p48
      %p55 = scmp.eq.s32.totalorder %s13, 1
      %p56 = por %p54, %p55
      %p57 = scmp.ne.s32.totalorder %s49, %s52
      %p58 = scmp.eq.s32.totalorder %s13, 0
      %p59 = por %p57, %p58
      %p60 = scmp.ne.s32.totalorder %s49, %s52
      %p61 = scmp.eq.s32.totalorder %s18, 1
      %p62 = por %p60, %p61
      %p63 = scmp.ne.s32.totalorder %s52, %s53
      %p64 = scmp.eq.s32.totalorder %s18, 0
      %p65 = por %p63, %p64
      %p66 = scmp.ne.s32.totalorder %s52, %s53
      %p67 = scmp.eq.s32.totalorder %s19, 1
      %p68 = por %p66, %p67
      %p70 = scmp.ne.s32.totalorder %s53, %s69
      %p71 = scmp.eq.s32.totalorder %s19, 0
      %p72 = por %p70, %p71
      %p73 = scmp.le.s32.totalorder 1, %s13
      %p74 = scmp.lt.s32.totalorder %s13, 3
      %p75 = pnand %p73, %p74
      %p76 = pneg %p75
      // Predicated region
      $region9: #{tpu_custom_call.1} parent=5 // pred_check
        _
      $region10: #{tpu_custom_call.1} parent=5 // pred_check_branch
        %78 = sbr.rel (%p75) target = $region12
      $region11: #{tpu_custom_call.1} parent=5 // pred_region
        %s79 = ssub.s32 %s13, 1
      $region12: #{tpu_custom_call.1} parent=5 // pred_fallthru
        _
      %p80 = scmp.lt.s32.totalorder %s13, 2
      // Predicated region
      $region13: #{tpu_custom_call.1} parent=5 // pred_check
        %p81 = pneg %p80
      $region14: #{tpu_custom_call.1} parent=5 // pred_check_branch
        %83 = sbr.rel (%p81) target = $region16
      $region15: #{tpu_custom_call.1} parent=5 // pred_region
        // Predicated region
        $region17: #{tpu_custom_call.1} parent=15 // pred_check
          %p84 = pneg %p33
        $region18: #{tpu_custom_call.1} parent=15 // pred_check_branch
          %86 = sbr.rel (%p84) target = $region20
        $region19: #{tpu_custom_call.1} parent=15 // pred_region
          %s87 = sand.u32 %s23, 1
          %s88 = scalar_lea.sflag [#allocation3], %s87
          %s89 = sand.u32 %s23, 1
          %s90 = smul.addr %s89, 8
          %s91 = scalar_lea.vmem [#allocation2], %s90
          %93 = vsyncadd %s88, 0
          %s94 = smul.addr %s13, 8
          %s95 = scalar_lea.hbm %s0, %s94
          %s97 = sshll.u32 %s95, 4
          %s98 = int_to_ptr.hbm [resolvable:$true] %s97
          %s99 = sshll.u32 %s91, 4
          %s100 = int_to_ptr.vmem [resolvable:$true] %s99
          %102 = dma.hbm_to_vmem [thread:$0]  %s98, 128, %s100, %s88
        $region20: #{tpu_custom_call.1} parent=15 // pred_fallthru
          _
      $region16: #{tpu_custom_call.1} parent=5 // pred_fallthru
        _
      %p103 = scmp.le.s32.totalorder 1, %s13
      %p104 = scmp.lt.s32.totalorder %s13, 3
      %p105 = pnand %p103, %p104
      %p106 = pneg %p105
      // Predicated region
      $region21: #{tpu_custom_call.1} parent=5 // pred_check
        _
      $region22: #{tpu_custom_call.1} parent=5 // pred_check_branch
        %108 = sbr.rel (%p105) target = $region24
      $region23: #{tpu_custom_call.1} parent=5 // pred_region
        %s109 = ssub.s32 %s13, 1
        %s110 = sand.u32 %s26, 1
        %s111 = scalar_lea.sflag [#allocation3], %s110
        %s112 = sand.u32 %s26, 1
        %s113 = smul.addr %s112, 8
        %s114 = scalar_lea.vmem [#allocation2], %s113
        // Predicated region
        $region25: #{tpu_custom_call.1} parent=23 // pred_check
          %p115 = pneg %p39
        $region26: #{tpu_custom_call.1} parent=23 // pred_check_branch
          %117 = sbr.rel (%p115) target = $region28
        $region27: #{tpu_custom_call.1} parent=23 // pred_region
          %119 = dma.done %s111, 128
        $region28: #{tpu_custom_call.1} parent=23 // pred_fallthru
          _
        %s120 = sand.u32 %s26, 1
        %s121 = scalar_lea.sflag [#allocation3], %s120
        %s122 = sand.u32 %s26, 1
        %s123 = smul.addr %s122, 8
        %s124 = scalar_lea.vmem [#allocation2], %s123
        %p125 = pneg %p39
        %p126 = pneg %p36
        %p127 = pneg %p65
        %p128 = pneg %p62
        %s129 = sand.u32 %s52, 1
        %s130 = scalar_lea.sflag [#allocation4], %s129
        %s131 = sand.u32 %s52, 1
        %s132 = smul.addr %s131, 8
        %s133 = scalar_lea.vmem [#allocation5], %s132
        %v134 = vld [vmem:[%s114] sm:$0xff]
        %v135 = vmax.f32 %v134, 0.0
        %v136 = vmul.f32 %v135, 0.8944
        %v137 = vmul.f32 %v136, %v135
        %v138 = vadd.f32 %v137, -0.4472
        %139 = vst [vmem:[%s133] sm:$0xff] %v138
        %s140 = sand.u32 %s52, 1
        %s141 = scalar_lea.sflag [#allocation4], %s140
        %s142 = sand.u32 %s52, 1
        %s143 = smul.addr %s142, 8
        %s144 = scalar_lea.vmem [#allocation5], %s143
        // Predicated region
        $region29: #{tpu_custom_call.1} parent=23 // pred_check
          %p145 = pneg %p62
        $region30: #{tpu_custom_call.1} parent=23 // pred_check_branch
          %147 = sbr.rel (%p145) target = $region32
        $region31: #{tpu_custom_call.1} parent=23 // pred_region
          %149 = vsyncadd %s141, 0
          %s150 = smul.addr %s18, 8
          %s151 = scalar_lea.hbm %s1, %s150
          %s153 = sshll.u32 %s144, 4
          %s154 = int_to_ptr.vmem [resolvable:$true] %s153
          %s155 = sshll.u32 %s151, 4
          %s156 = int_to_ptr.hbm [resolvable:$true] %s155
          %158 = dma.vmem_to_hbm [thread:$0]  %s154, 128, %s156, %s141
        $region32: #{tpu_custom_call.1} parent=23 // pred_fallthru
          _
      $region24: #{tpu_custom_call.1} parent=5 // pred_fallthru
        _
      %p159 = scmp.le.s32.totalorder 2, %s13
      // Predicated region
      $region33: #{tpu_custom_call.1} parent=5 // pred_check
        %p160 = pneg %p159
      $region34: #{tpu_custom_call.1} parent=5 // pred_check_branch
        %162 = sbr.rel (%p160) target = $region36
      $region35: #{tpu_custom_call.1} parent=5 // pred_region
        %s163 = ssub.s32 %s13, 2
        // Predicated region
        $region37: #{tpu_custom_call.1} parent=35 // pred_check
          %p164 = pneg %p68
        $region38: #{tpu_custom_call.1} parent=35 // pred_check_branch
          %166 = sbr.rel (%p164) target = $region40
        $region39: #{tpu_custom_call.1} parent=35 // pred_region
          %s167 = sand.u32 %s53, 1
          %s168 = scalar_lea.sflag [#allocation4], %s167
          %s169 = sand.u32 %s53, 1
          %s170 = smul.addr %s169, 8
          %s171 = scalar_lea.vmem [#allocation5], %s170
          %173 = dma.done %s168, 128
        $region40: #{tpu_custom_call.1} parent=35 // pred_fallthru
          _
      $region36: #{tpu_custom_call.1} parent=5 // pred_fallthru
        _
    $region6: #{tpu_custom_call.1} parent=1 // loop_footer
      %s17 = sadd.s32 1, %s13
    $region7: #{tpu_custom_call.1} parent=1 // loop_footer_branch
      %12 = sbr.rel target = $region3
    $region8: #{tpu_custom_call.1} parent=1 // loop_exit
      _
    %174 = vsyncpa [#allocation3], 1
    %s175 = scalar_lea.sflag [#allocation3], 1
    %176 = vsyncpa %s175, 1
    %177 = vsyncpa [#allocation4], 1
    %s178 = scalar_lea.sflag [#allocation4], 1
    %179 = vsyncpa %s178, 1

</llo_original>
